<compile_context>
chip_gen: v6e
topology: v6e:2x2x1
jax: 0.10.0
libtpu: 0.0.40
codegen_flags: <defaults>
</compile_context>

<pallas_src>
import jax
import jax.numpy as jnp
from jax.experimental import pallas as pl
from jax.experimental.pallas import tpu as pltpu


def _round_up(x: int, m: int) -> int:
    return ((x + m - 1) // m) * m


def _sublane(itemsize: int) -> int:
    # Rows per sublane tile: f32 -> 8, bf16 -> 16, int8/fp8 -> 32.
    return 8 if itemsize >= 4 else (16 if itemsize == 2 else 32)


def _vmem_limit_bytes() -> int:
    """Generation-aware scoped-VMEM limit (~3/4 of physical, capped at 96 MiB).

    v5e/v6e: 128 MiB physical -> 96 MiB limit (bigger tiles, fewer grid steps).
    v7x:      64 MiB physical -> 48 MiB limit (keeps the 3x2 double-buffered
                                               tiles + f32 temporaries in VMEM).
    """
    try:
        physical = int(pltpu.get_tpu_info().vmem_capacity_bytes)
    except Exception:
        physical = 64 * 1024 * 1024  # conservative: v7x per-TensorCore VMEM
    return min(physical * 3 // 4, 96 * 1024 * 1024)


def _choose_block_rows(b: int, d: int, itemsize: int, vmem_limit: int,
                       target_block_bytes: int = 4 * 1024 * 1024) -> int:
    """Rows per block: ~4 MiB per (lane-padded) input tile, within VMEM budget."""
    sub = _sublane(itemsize)
    row_bytes = _round_up(d, 128) * itemsize           # VMEM pads D to 128 lanes
    budget = int(vmem_limit * 0.65)                    # headroom for f32 temps
    max_rows_budget = max(sub, budget // (6 * row_bytes))   # 3 inputs x 2 bufs
    target_rows = max(sub, target_block_bytes // row_bytes)
    b_rows = _round_up(b, sub)
    tb = min(target_rows, max_rows_budget, b_rows)
    return max(sub, (tb // sub) * sub)
    # Note: for extremely wide D (where even an 8-row tile exceeds the budget) a
    # second grid axis over D with a (TB, 1) partial-sum scratch would be needed;
    # not required for embedding-sized D.


def _make_triplet_kernel(margin: float, b_true: int, tb: int,
                         nb_per_split: int, needs_mask: bool):
    margin = float(margin)  # compile-time constant (NOT a traced jnp scalar)

    def triplet_kernel(a_ref, p_ref, n_ref, o_ref):
        c = pl.program_id(0)          # batch split ("parallel", one per core)
        i = pl.program_id(1)          # blocks within the split ("arbitrary")

        @pl.when(i == 0)
        def _init():
            o_ref[...] = jnp.zeros_like(o_ref)

        # Compute in f32 regardless of input dtype (v5e has no bf16 VPU).
        a = a_ref[...].astype(jnp.float32)
        p = p_ref[...].astype(jnp.float32)
        n = n_ref[...].astype(jnp.float32)

        # Fused: ||a-p||^2 - ||a-n||^2 == sum((n - p) * (2a - p - n), axis=-1)
        # -> one VPU product + one XLU lane-reduce instead of two of each.
        diff = jnp.sum((n - p) * (2.0 * a - p - n), axis=-1, keepdims=True)  # (TB,1)
        loss = jnp.maximum(diff + margin, 0.0)                               # relu

        if needs_mask:
            # Rows past the true batch size (tail block / split overhang) hold
            # garbage VMEM; zero them *after* the relu so NaN/Inf cannot leak.
            blk = c * nb_per_split + i
            row = jax.lax.broadcasted_iota(jnp.int32, (tb, 1), 0) + blk * tb
            loss = jnp.where(row < b_true, loss, 0.0)

        # Per-block sum, broadcast-added to the whole resident (1, 8, 128)
        # output tile (one vreg VPU add); the wrapper reads element [c, 0, 0].
        block_sum = jnp.sum(loss, axis=0, keepdims=True).reshape(1, 1, 1)
        o_ref[...] = o_ref[...] + block_sum

    return triplet_kernel


def triplet_loss_pallas(anchor, positive, negative, margin: float = 1.0,
                        block_rows: int | None = None, num_splits: int = 2):
    """Batch-averaged triplet loss. anchor/positive/negative: (B, D)."""
    assert anchor.shape == positive.shape == negative.shape
    assert anchor.ndim == 2
    B, D = anchor.shape
    itemsize = jnp.dtype(anchor.dtype).itemsize
    vmem_limit = _vmem_limit_bytes()

    sub = _sublane(itemsize)
    if block_rows is None:
        tb = _choose_block_rows(B, D, itemsize, vmem_limit)
    else:
        tb = max(sub, (int(block_rows) // sub) * sub)

    nb = -(-B // tb)                                  # cdiv: total batch blocks
    num_splits = max(1, min(int(num_splits), nb))     # one per TensorCore (v7x)
    nb_per_split = -(-nb // num_splits)
    covered = num_splits * nb_per_split * tb
    needs_mask = covered != B                         # tail block / overhang
    overhang = num_splits * nb_per_split > nb
    last_block = nb - 1

    if overhang:
        # Splits may logically run past the last real block; clamp keeps the
        # DMA in bounds and the kernel's row mask zeroes those rows anyway.
        def in_map(c, i):
            return (jnp.minimum(c * nb_per_split + i, last_block), 0)
    else:
        def in_map(c, i):
            return (c * nb_per_split + i, 0)

    in_spec = pl.BlockSpec((tb, D), in_map)

    partials = pl.pallas_call(
        _make_triplet_kernel(margin, B, tb, nb_per_split, needs_mask),
        # (8, 128)-aligned per-split partial sums; every element of tile c holds
        # split c's sum. 4 KiB per split -> negligible output traffic.
        out_shape=jax.ShapeDtypeStruct((num_splits, 8, 128), jnp.float32),
        grid_spec=pltpu.PrefetchScalarGridSpec(
            num_scalar_prefetch=0,
            grid=(num_splits, nb_per_split),
            in_specs=[in_spec, in_spec, in_spec],
            out_specs=pl.BlockSpec((1, 8, 128), lambda c, i: (c, 0, 0)),
        ),
        compiler_params=pltpu.CompilerParams(
            dimension_semantics=("parallel", "arbitrary"),
            vmem_limit_bytes=vmem_limit,
        ),
    )(anchor, positive, negative)

    # Tiny final reduction + batch mean in the wrapper (num_splits scalars).
    return jnp.sum(partials[:, 0, 0]) / B


def triplet_loss_ref(anchor, positive, negative, margin: float = 1.0):
    d_pos = jnp.sum((anchor - positive) ** 2, axis=1)
    d_neg = jnp.sum((anchor - negative) ** 2, axis=1)
    return jnp.mean(jax.nn.relu(d_pos - d_neg + margin))


if __name__ == "__main__":
    # Small shapes consistent with the module (batch of embedding triplets).
    key = jax.random.PRNGKey(0)
    k_a, k_p, k_n = jax.random.split(key, 3)
    B, D = 8, 32
    anchor = jax.random.normal(k_a, (B, D), dtype=jnp.float32)
    positive = jax.random.normal(k_p, (B, D), dtype=jnp.float32)
    negative = jax.random.normal(k_n, (B, D), dtype=jnp.float32)

    loss = triplet_loss_pallas(anchor, positive, negative, margin=1.0)
    jax.block_until_ready(loss)
    ref = triplet_loss_ref(anchor, positive, negative, margin=1.0)
    assert jnp.allclose(loss, ref, rtol=5e-4, atol=5e-4), (loss, ref)

    # Exercise the multi-block, 2-way-split, tail-masked path (B % TB != 0).
    k_a2, k_p2, k_n2 = jax.random.split(jax.random.PRNGKey(1), 3)
    B2, D2 = 300, 256
    a2 = jax.random.normal(k_a2, (B2, D2), dtype=jnp.float32)
    p2 = jax.random.normal(k_p2, (B2, D2), dtype=jnp.float32)
    n2 = jax.random.normal(k_n2, (B2, D2), dtype=jnp.float32)
    loss2 = triplet_loss_pallas(a2, p2, n2, margin=1.0, block_rows=128)
    jax.block_until_ready(loss2)
    ref2 = triplet_loss_ref(a2, p2, n2, margin=1.0)
    assert jnp.allclose(loss2, ref2, rtol=5e-4, atol=5e-4), (loss2, ref2)

    print("KERNEL_OK")
</pallas_src>

<mosaic_0001>
module attributes {stable_mosaic.version = 11 : i64} {
  func.func @triplet_kernel(%arg0: i32, %arg1: i32, %arg2: memref<8x32xf32, #tpu.memory_space<vmem>>, %arg3: memref<8x32xf32, #tpu.memory_space<vmem>>, %arg4: memref<8x32xf32, #tpu.memory_space<vmem>>, %arg5: memref<1x8x128xf32, #tpu.memory_space<vmem>>) attributes {dimension_semantics = [#tpu.dimension_semantics<parallel>, #tpu.dimension_semantics<arbitrary>], iteration_bounds = array<i64: 1, 1>, scalar_prefetch = 0 : i64, scratch_operands = 0 : i64, tpu.core_type = #tpu.core_type<tc>, window_params = [{transform_indices = @transform_0, window_bounds = array<i64: 8, 32>}, {transform_indices = @transform_1, window_bounds = array<i64: 8, 32>}, {transform_indices = @transform_2, window_bounds = array<i64: 8, 32>}, {transform_indices = @transform_3, window_bounds = array<i64: 1, 8, 128>}]} {
    %c0_i32 = arith.constant 0 : i32
    %0 = arith.cmpi eq, %arg1, %c0_i32 : i32
    %1 = arith.extui %0 : i1 to i32
    %c0_i32_0 = arith.constant 0 : i32
    %2 = arith.cmpi ne, %1, %c0_i32_0 : i32
    scf.if %2 {
      %cst_16 = arith.constant 0.000000e+00 : f32
      %25 = vector.broadcast %cst_16 : f32 to vector<1x8x128xf32>
      %c0_17 = arith.constant 0 : index
      %c0_18 = arith.constant 0 : index
      %c0_19 = arith.constant 0 : index
      %26 = vector.load %arg5[%c0_17, %c0_18, %c0_19] : memref<1x8x128xf32, #tpu.memory_space<vmem>>, vector<1x8x128xf32>
      tpu.vector_store %arg5[%c0_17, %c0_18, %c0_19], %25 {strides = array<i32>} : memref<1x8x128xf32, #tpu.memory_space<vmem>>, vector<1x8x128xf32>,
    } else {
    }
    %c0 = arith.constant 0 : index
    %c0_1 = arith.constant 0 : index
    %3 = vector.load %arg2[%c0, %c0_1] : memref<8x32xf32, #tpu.memory_space<vmem>>, vector<8x32xf32>
    %c0_2 = arith.constant 0 : index
    %c0_3 = arith.constant 0 : index
    %4 = vector.load %arg3[%c0_2, %c0_3] : memref<8x32xf32, #tpu.memory_space<vmem>>, vector<8x32xf32>
    %c0_4 = arith.constant 0 : index
    %c0_5 = arith.constant 0 : index
    %5 = vector.load %arg4[%c0_4, %c0_5] : memref<8x32xf32, #tpu.memory_space<vmem>>, vector<8x32xf32>
    %6 = arith.subf %5, %4 : vector<8x32xf32>
    %cst = arith.constant 2.000000e+00 : f32
    %7 = vector.broadcast %cst : f32 to vector<8x32xf32>
    %8 = arith.mulf %7, %3 : vector<8x32xf32>
    %9 = arith.subf %8, %4 : vector<8x32xf32>
    %10 = arith.subf %9, %5 : vector<8x32xf32>
    %11 = arith.mulf %6, %10 : vector<8x32xf32>
    %cst_6 = arith.constant dense<0.000000e+00> : vector<8xf32>
    %12 = vector.multi_reduction <add>, %11, %cst_6 [1] : vector<8x32xf32> to vector<8xf32>
    %13 = vector.shape_cast %12 : vector<8xf32> to vector<8x1xf32>
    %cst_7 = arith.constant 1.000000e+00 : f32
    %14 = vector.broadcast %cst_7 : f32 to vector<8x1xf32>
    %15 = arith.addf %13, %14 : vector<8x1xf32>
    %cst_8 = arith.constant 0.000000e+00 : f32
    %16 = vector.broadcast %cst_8 : f32 to vector<8x1xf32>
    %17 = arith.maximumf %15, %16 : vector<8x1xf32>
    %cst_9 = arith.constant dense<0.000000e+00> : vector<1xf32>
    %18 = vector.multi_reduction <add>, %17, %cst_9 [0] : vector<8x1xf32> to vector<1xf32>
    %19 = vector.shape_cast %18 : vector<1xf32> to vector<1x1xf32>
    %20 = vector.shape_cast %19 : vector<1x1xf32> to vector<1x1x1xf32>
    %c0_10 = arith.constant 0 : index
    %c0_11 = arith.constant 0 : index
    %c0_12 = arith.constant 0 : index
    %21 = vector.load %arg5[%c0_10, %c0_11, %c0_12] : memref<1x8x128xf32, #tpu.memory_space<vmem>>, vector<1x8x128xf32>
    %22 = vector.broadcast %20 : vector<1x1x1xf32> to vector<1x8x128xf32>
    %23 = arith.addf %21, %22 : vector<1x8x128xf32>
    %c0_13 = arith.constant 0 : index
    %c0_14 = arith.constant 0 : index
    %c0_15 = arith.constant 0 : index
    %24 = vector.load %arg5[%c0_13, %c0_14, %c0_15] : memref<1x8x128xf32, #tpu.memory_space<vmem>>, vector<1x8x128xf32>
    tpu.vector_store %arg5[%c0_13, %c0_14, %c0_15], %23 {strides = array<i32>} : memref<1x8x128xf32, #tpu.memory_space<vmem>>, vector<1x8x128xf32>,
    return
  }
  func.func @transform_0(%arg0: i32, %arg1: i32) -> (i32, i32) {
    %c1_i32 = arith.constant 1 : i32
    %0 = arith.muli %arg0, %c1_i32 : i32
    %1 = arith.addi %0, %arg1 : i32
    %c0_i32 = arith.constant 0 : i32
    %c0_i32_0 = arith.constant 0 : i32
    return %1, %c0_i32 : i32, i32
  }
  func.func @transform_1(%arg0: i32, %arg1: i32) -> (i32, i32) {
    %c1_i32 = arith.constant 1 : i32
    %0 = arith.muli %arg0, %c1_i32 : i32
    %1 = arith.addi %0, %arg1 : i32
    %c0_i32 = arith.constant 0 : i32
    %c0_i32_0 = arith.constant 0 : i32
    return %1, %c0_i32 : i32, i32
  }
  func.func @transform_2(%arg0: i32, %arg1: i32) -> (i32, i32) {
    %c1_i32 = arith.constant 1 : i32
    %0 = arith.muli %arg0, %c1_i32 : i32
    %1 = arith.addi %0, %arg1 : i32
    %c0_i32 = arith.constant 0 : i32
    %c0_i32_0 = arith.constant 0 : i32
    return %1, %c0_i32 : i32, i32
  }
  func.func @transform_3(%arg0: i32, %arg1: i32) -> (i32, i32, i32) {
    %c0_i32 = arith.constant 0 : i32
    %c0_i32_0 = arith.constant 0 : i32
    %c0_i32_1 = arith.constant 0 : i32
    return %arg0, %c0_i32, %c0_i32_0 : i32, i32, i32
  }
}

</mosaic_0001>

<llo_original>
// kernel: tpu_custom_call.1
$region0: #{tpu_custom_call.1}
  #allocation0 [shape = 'u32[]', space=smem, size = 0x4, offset = 0x4, fixed_abs, tag = 'smem constant byte address 0x4 - core index']
  #allocation1 [shape = 'u32[144,128]{1,0:T(1,128)}', space=vmem, size = 0x12000, scoped, tag = 'internal scratch']
  %s0 = inlined_call_operand.hbm [shape: f32[8,32], index: 0, kind: input, shape index: {}]
  %s1 = inlined_call_operand.hbm [shape: f32[8,32], index: 1, kind: input, shape index: {}]
  %s2 = inlined_call_operand.hbm [shape: f32[8,32], index: 2, kind: input, shape index: {}]
  %s3 = inlined_call_operand.hbm [shape: f32[1,8,128], index: 3, kind: output, shape index: {}]
  %s4 = sld [smem:[#allocation0]]
  $region38: #{tpu_custom_call.1} parent=0
    _
  %s6 = ssub.s32 1, %s4
  %s7 = scalar_select 0, %s6, %s4
  $region1: #{tpu_custom_call.1} parent=0
    #allocation2 [shape = 'u8[4096]{0}', space=vmem, size = 0x1000, scoped, tag = 'input window, operand 0, single buffered']
    #allocation3 [shape = 's32[1]{0}', space=sflag, size = 0x4, scoped, tag = 'scoped memory for tpu_custom_call.1']
    #allocation4 [shape = 's32[1]{0}', space=sflag, size = 0x4, scoped, tag = 'scoped memory for tpu_custom_call.1']
    #allocation5 [shape = 'u8[4096]{0}', space=vmem, size = 0x1000, scoped, tag = 'input window, operand 1, single buffered']
    #allocation6 [shape = 's32[1]{0}', space=sflag, size = 0x4, scoped, tag = 'scoped memory for tpu_custom_call.1']
    #allocation7 [shape = 'u8[4096]{0}', space=vmem, size = 0x1000, scoped, tag = 'input window, operand 2, single buffered']
    #allocation8 [shape = 'u8[4096]{0}', space=vmem, size = 0x1000, scoped, tag = 'output window, operand 0, single buffered']
    %8 = vsyncpa [#allocation3], 0
    %9 = vsyncpa [#allocation6], 0
    %10 = vsyncpa [#allocation4], 0
    // Predicated region
    $region2: #{tpu_custom_call.1} parent=1 // pred_check
      _
    $region3: #{tpu_custom_call.1} parent=1 // pred_check_branch
      %12 = sbr.rel (0) target = $region5
    $region4: #{tpu_custom_call.1} parent=1 // pred_region
      %s13 = sadd.s32 0, 0
      %s15 = ssub.s32 128, 128
      %16 = vsyncadd [#allocation3], %s15
      %s17 = smul.addr %s13, 128
      %s18 = scalar_lea.hbm %s0, %s17
      %s20 = sshll.u32 [#allocation2], 4
      %s21 = int_to_ptr.vmem [resolvable:$true] %s20
      %23 = dma.hbm_to_vmem [thread:$0]  %s18, 128, %s21, [#allocation3]
    $region5: #{tpu_custom_call.1} parent=1 // pred_fallthru
      _
    // Predicated region
    $region6: #{tpu_custom_call.1} parent=1 // pred_check
      _
    $region7: #{tpu_custom_call.1} parent=1 // pred_check_branch
      %25 = sbr.rel (0) target = $region9
    $region8: #{tpu_custom_call.1} parent=1 // pred_region
      %s26 = sadd.s32 0, 0
      %s28 = ssub.s32 128, 128
      %29 = vsyncadd [#allocation6], %s28
      %s30 = smul.addr %s26, 128
      %s31 = scalar_lea.hbm %s1, %s30
      %s33 = sshll.u32 [#allocation5], 4
      %s34 = int_to_ptr.vmem [resolvable:$true] %s33
      %36 = dma.hbm_to_vmem [thread:$0]  %s31, 128, %s34, [#allocation6]
    $region9: #{tpu_custom_call.1} parent=1 // pred_fallthru
      _
    // Predicated region
    $region10: #{tpu_custom_call.1} parent=1 // pred_check
      _
    $region11: #{tpu_custom_call.1} parent=1 // pred_check_branch
      %38 = sbr.rel (0) target = $region13
    $region12: #{tpu_custom_call.1} parent=1 // pred_region
      %s39 = sadd.s32 0, 0
      %s41 = ssub.s32 128, 128
      %42 = vsyncadd [#allocation6], %s41
      %s43 = smul.addr %s39, 128
      %s44 = scalar_lea.hbm %s2, %s43
      %s46 = sshll.u32 [#allocation7], 4
      %s47 = int_to_ptr.vmem [resolvable:$true] %s46
      %49 = dma.hbm_to_vmem [thread:$0]  %s44, 128, %s47, [#allocation6]
    $region13: #{tpu_custom_call.1} parent=1 // pred_fallthru
      _
    // Predicated region
    $region14: #{tpu_custom_call.1} parent=1 // pred_check
      _
    $region15: #{tpu_custom_call.1} parent=1 // pred_check_branch
      %51 = sbr.rel (0) target = $region17
    $region16: #{tpu_custom_call.1} parent=1 // pred_region
      %52 = dma.done [#allocation3], 128
    $region17: #{tpu_custom_call.1} parent=1 // pred_fallthru
      _
    // Predicated region
    $region18: #{tpu_custom_call.1} parent=1 // pred_check
      _
    $region19: #{tpu_custom_call.1} parent=1 // pred_check_branch
      %54 = sbr.rel (0) target = $region21
    $region20: #{tpu_custom_call.1} parent=1 // pred_region
      %55 = dma.done [#allocation6], 128
    $region21: #{tpu_custom_call.1} parent=1 // pred_fallthru
      _
    // Predicated region
    $region22: #{tpu_custom_call.1} parent=1 // pred_check
      _
    $region23: #{tpu_custom_call.1} parent=1 // pred_check_branch
      %57 = sbr.rel (0) target = $region25
    $region24: #{tpu_custom_call.1} parent=1 // pred_region
      %58 = dma.done [#allocation6], 128
    $region25: #{tpu_custom_call.1} parent=1 // pred_fallthru
      _
    %s59 = sadd.s32 0, 0
    %s60 = sadd.s32 0, 0
    %s61 = sadd.s32 0, 0
    %p62 = scmp.eq.s32.totalorder 0, 0
    // Predicated region
    $region26: #{tpu_custom_call.1} parent=1 // pred_check
      %p63 = pneg %p62
    $region27: #{tpu_custom_call.1} parent=1 // pred_check_branch
      %65 = sbr.rel (%p63) target = $region29
    $region28: #{tpu_custom_call.1} parent=1 // pred_region
      %66 = vst [vmem:[#allocation8] sm:$0xff] 0.0
    $region29: #{tpu_custom_call.1} parent=1 // pred_fallthru
      _
    %v67 = vld [vmem:[#allocation2] sm:$0xff]
    %v68 = vld [vmem:[#allocation5] sm:$0xff]
    %v69 = vld [vmem:[#allocation7] sm:$0xff]
    %v70 = vsub.f32 %v69, %v68
    %v71 = vmul.f32 %v67, 2.0
    %v72 = vsub.f32 %v71, %v68
    %v73 = vsub.f32 %v72, %v69
    %v74 = vmul.f32 %v70, %v73
    %vm75 = vcmask 261120
    %v76 = vsel %vm75, %v74, 0.0
    %77 = vadd.xlane.f32.xlu0 %v76
    %v78 = vpop.xlane.xlu0 %77
    %v79 = vadd.f32 %v78, 1.0
    %v80 = vmax.f32 %v79, 0.0
    %v81 = vrot.slane %v80, 4
    %v82 = vadd.f32 %v80, %v81
    %v83 = vrot.slane %v82, 2
    %v84 = vadd.f32 %v82, %v83
    %v85 = vrot.slane %v84, 1
    %v86 = vadd.f32 %v84, %v85
    %v87 = vld [vmem:[#allocation8] sm:$0xff]
    %v88 = vadd.f32 %v87, %v86
    %89 = vst [vmem:[#allocation8] sm:$0xff] %v88
    // Predicated region
    $region30: #{tpu_custom_call.1} parent=1 // pred_check
      _
    $region31: #{tpu_custom_call.1} parent=1 // pred_check_branch
      %91 = sbr.rel (0) target = $region33
    $region32: #{tpu_custom_call.1} parent=1 // pred_region
      %s93 = ssub.s32 128, 128
      %94 = vsyncadd [#allocation4], %s93
      %s96 = sshll.u32 [#allocation8], 4
      %s97 = int_to_ptr.vmem [resolvable:$true] %s96
      %99 = dma.vmem_to_hbm [thread:$0]  %s97, 128, %s3, [#allocation4]
    $region33: #{tpu_custom_call.1} parent=1 // pred_fallthru
      _
    // Predicated region
    $region34: #{tpu_custom_call.1} parent=1 // pred_check
      _
    $region35: #{tpu_custom_call.1} parent=1 // pred_check_branch
      %101 = sbr.rel (0) target = $region37
    $region36: #{tpu_custom_call.1} parent=1 // pred_region
      %102 = dma.done [#allocation4], 128
    $region37: #{tpu_custom_call.1} parent=1 // pred_fallthru
      _
    %103 = vsyncpa [#allocation3], 1
    %104 = vsyncpa [#allocation6], 1
    %105 = vsyncpa [#allocation4], 1

</llo_original>
